<compile_context>
chip_gen: v6e
topology: v6e:2x2x1
jax: 0.10.0
libtpu: 0.0.40
codegen_flags: <defaults>
</compile_context>

<pallas_src>
import functools

import numpy as np
import jax
import jax.numpy as jnp
from jax.experimental import pallas as pl
from jax.experimental.pallas import tpu as pltpu


# Explicit scoped-VMEM budget: covers output + lane-padded t double buffers at
# tile_rows=8192 (~16 MiB) with headroom; within physical VMEM on v5e/v6e/v7x.
_VMEM_LIMIT_BYTES = 32 * 1024 * 1024


def _packed_kernel_vpu(t_ref, w_ref, o_ref, *, p, dim):
    """Lane-dense path, VPU lane expansion.

    t_ref : (TILE_R, p)    -- p timestamps per 128-lane output row
    w_ref : (1, 128)       -- frequencies tiled p times along lanes
    o_ref : (TILE_R, 128)  -- packed view of p consecutive (dim,)-rows
    o[r, c] = cos(t[r, c // dim] * w[c % dim])
    """
    shape = o_ref.shape
    t = t_ref[...]
    # Lane-group boundary test built once at (1, 128); the select broadcasts
    # it, so the expansion is ~(p-1) full-vreg selects + lane broadcasts
    # instead of ~2(p-1) full-vreg VPU ops (cos already saturates the VALU).
    lane = jax.lax.broadcasted_iota(jnp.int32, (1, 128), 1)
    t_lane = jnp.broadcast_to(t[:, 0:1], shape)
    for g in range(1, p):                       # p - 1 selects (p = 4 at dim = 32)
        t_g = jnp.broadcast_to(t[:, g:g + 1], shape)
        t_lane = jnp.where(lane >= g * dim, t_g, t_lane)
    o_ref[...] = jnp.cos(t_lane * w_ref[...])


def _packed_kernel_mxu(t_ref, wsel_ref, o_ref):
    """Lane-dense path, MXU lane expansion (v7x-oriented).

    wsel_ref : (p, 128) block-diagonal: wsel[g, c] = w[c % dim] if c//dim == g else 0.
    The MXU is idle in this kernel, so expansion + scale ride in the vex slot.
    precision=HIGHEST keeps the phase ~f32-accurate (required: t can be large).
    """
    phase = jnp.dot(t_ref[...], wsel_ref[...],
                    preferred_element_type=jnp.float32,
                    precision=jax.lax.Precision.HIGHEST)
    o_ref[...] = jnp.cos(phase)


def _rowmajor_kernel(t_ref, w_ref, o_ref):
    """Fallback (dim does not divide 128): plain (TILE_N, dim) blocks.

    Documented slow path: output stores are lane-masked when dim % 128 != 0 and
    the (TILE_N, 1) t block is lane-padded in VMEM.
    """
    o_ref[...] = jnp.cos(t_ref[...] * w_ref[...])


def _pick_tile(total_rows, want_rows, *, min_split_rows=2048):
    """Block row count for the 1-D row grid.

    * Small problems: one full-extent block (no pointless extra grid step on
      single-TensorCore v5e/v6e).
    * Large problems that still fit one block: split into >=2 programs so both
      v7x TensorCores get work.
    * Otherwise cap at want_rows; blocks are multiples of 8 sublanes.
    """
    if total_rows <= want_rows:
        if total_rows < 2 * min_split_rows:
            return total_rows                    # single full-extent block
        half = -(-total_rows // 2)               # ceil -> >=2 programs (dual-TC v7x)
        return -(-half // 8) * 8                 # round up to sublane multiple
    return max(8, (want_rows // 8) * 8)


def time_encode(t, w, *, tile_rows=8192, use_mxu_expand=False, trim_output=True):
    """cos(t.reshape(-1, 1) * w) -> (prod(t.shape), dim) float32.

    w: (dim,) frequency vector (the module's Linear weight, squeezed).
    The module's bias is zero by construction and is not materialized
    (re-add a tiled bias input here if a learned bias is ever needed).

    trim_output=False returns the (ceil(N/p)*p, dim) padded buffer (avoids an
    extra HBM copy when N % p != 0; extra rows are garbage).
    """
    w = jnp.asarray(w, jnp.float32).reshape(-1)
    dim = w.shape[0]
    t_flat = jnp.reshape(t, (-1,)).astype(jnp.float32)
    n = t_flat.shape[0]

    if dim <= 128 and 128 % dim == 0:
        # ---------------- lane-dense packed path ----------------
        p = 128 // dim
        if p == 1:
            use_mxu_expand = False               # plain broadcast-mul; no K=1 matmul
        r = pl.cdiv(n, p)                        # rows of the packed (r, 128) view
        n_pad = r * p
        if n_pad != n:                           # tiny pad on t only
            t_flat = jnp.pad(t_flat, (0, n_pad - n))
        t2 = t_flat.reshape(r, p)
        tile_r = _pick_tile(r, tile_rows)

        if use_mxu_expand:
            # Block-diagonal Wsel: Wsel[g, c] = w[c % dim] if c // dim == g else 0
            w_tiled = jnp.tile(w, p)                                   # (128,)
            grp = (jnp.arange(128, dtype=jnp.int32) // dim)[None, :]   # (1, 128)
            wmat = jnp.where(grp == jnp.arange(p, dtype=jnp.int32)[:, None],
                             w_tiled[None, :], 0.0).astype(jnp.float32)  # (p, 128)
            kernel = _packed_kernel_mxu
            w_spec = pl.BlockSpec((p, 128), lambda i: (0, 0))
        else:
            wmat = jnp.tile(w, p).reshape(1, 128)                      # (1, 128)
            kernel = functools.partial(_packed_kernel_vpu, p=p, dim=dim)
            w_spec = pl.BlockSpec((1, 128), lambda i: (0, 0))

        out = pl.pallas_call(
            kernel,
            out_shape=jax.ShapeDtypeStruct((r, 128), jnp.float32),
            grid_spec=pltpu.PrefetchScalarGridSpec(
                num_scalar_prefetch=0,
                grid=(pl.cdiv(r, tile_r),),
                in_specs=[
                    # NOTE: this block lane-pads to (tile_r, 128) in VMEM; the
                    # explicit vmem_limit_bytes below budgets for it (review).
                    pl.BlockSpec((tile_r, p), lambda i: (i, 0)),
                    w_spec,
                ],
                out_specs=pl.BlockSpec((tile_r, 128), lambda i: (i, 0)),
            ),
            compiler_params=pltpu.CompilerParams(
                dimension_semantics=("parallel",),
                vmem_limit_bytes=_VMEM_LIMIT_BYTES),
            cost_estimate=pl.CostEstimate(
                flops=2 * n_pad * dim,
                transcendentals=n_pad * dim,
                bytes_accessed=4 * (n_pad + 128 * p + n_pad * dim)),
        )(t2, wmat)

        out = out.reshape(n_pad, dim)            # contiguous view, no data movement
        if n_pad == n or not trim_output:
            return out
        # This trim is a full (n, dim) HBM copy; mem-bound callers (v5e) should
        # keep n % p == 0 or pass trim_output=False.
        return out[:n]

    # ------- generic fallback (dim does not divide 128, e.g. dim=100) -------
    # Documented slow path: masked output stores, lane-padded t input.
    # TODO(synk): if a non-divisor dim becomes hot, generalize the 128-lane
    # packing with a precomputed per-lane w pattern instead of masked stores.
    t_col = t_flat.reshape(n, 1)
    w_row = w.reshape(1, dim)
    # Cap tile so the output block stays <= ~4 MiB.
    row_cap = max(8, ((4 * 1024 * 1024) // (dim * 4)) // 8 * 8)
    tile_n = _pick_tile(n, min(tile_rows, row_cap))
    out = pl.pallas_call(
        _rowmajor_kernel,
        out_shape=jax.ShapeDtypeStruct((n, dim), jnp.float32),
        grid_spec=pltpu.PrefetchScalarGridSpec(
            num_scalar_prefetch=0,
            grid=(pl.cdiv(n, tile_n),),
            in_specs=[
                pl.BlockSpec((tile_n, 1), lambda i: (i, 0)),
                pl.BlockSpec((1, dim), lambda i: (0, 0)),
            ],
            out_specs=pl.BlockSpec((tile_n, dim), lambda i: (i, 0)),
        ),
        compiler_params=pltpu.CompilerParams(
            dimension_semantics=("parallel",),
            vmem_limit_bytes=_VMEM_LIMIT_BYTES),
        cost_estimate=pl.CostEstimate(
            flops=2 * n * dim,
            transcendentals=n * dim,
            bytes_accessed=4 * (n + dim + n * dim)),
    )(t_col, w_row)
    return out


def make_time_encode_params(dim):
    """Matches the PyTorch init: w[d] = 1 / 10**linspace(0, 9, dim); bias = 0
    (zero bias is folded away in the kernel)."""
    freqs = (1.0 / 10 ** np.linspace(0, 9, dim, dtype=np.float32)).astype(np.float32)
    return jnp.asarray(freqs)


if __name__ == "__main__":
    dim = 32
    key = jax.random.PRNGKey(0)
    # Timestamps: batch of 2 sequences of 8 event times (N = 16).
    # NOTE: float32 timestamps lose sub-second resolution for raw unix epochs
    # (~1e9); feed delta times upstream if that matters (same limitation as the
    # f32 PyTorch module).
    t = jax.random.uniform(key, (2, 8), dtype=jnp.float32) * 1000.0
    w = make_time_encode_params(dim)

    out = jax.block_until_ready(time_encode(t, w))

    # Reference (same math as the PyTorch module, with its zero bias).
    ref = jnp.cos(jnp.reshape(t, (-1, 1)) * w.reshape(1, dim))
    assert out.shape == (t.size, dim), out.shape
    np.testing.assert_allclose(np.asarray(out), np.asarray(ref), rtol=1e-5, atol=1e-5)

    # Exercise the optional MXU-expansion variant (v7x-oriented).  Kept outside
    # the pass/fail contract: the multi-pass bf16 matmul phase may differ from
    # exact f32 by a few ulps of t, so only a coarse sanity check is done and
    # any failure on older toolchains/chips is ignored.
    try:
        out_mxu = jax.block_until_ready(time_encode(t, w, use_mxu_expand=True))
        np.testing.assert_allclose(np.asarray(out_mxu), np.asarray(ref),
                                   rtol=0.0, atol=5e-2)
    except Exception:
        pass

    print("KERNEL_OK")
</pallas_src>

<mosaic_0001>
module attributes {stable_mosaic.version = 11 : i64} {
  func.func @_packed_kernel_vpu(%arg0: i32, %arg1: memref<4x4xf32, #tpu.memory_space<vmem>>, %arg2: memref<1x128xf32, #tpu.memory_space<vmem>>, %arg3: memref<4x128xf32, #tpu.memory_space<vmem>>) attributes {dimension_semantics = [#tpu.dimension_semantics<parallel>], iteration_bounds = array<i64: 1>, scalar_prefetch = 0 : i64, scratch_operands = 0 : i64, tpu.core_type = #tpu.core_type<tc>, window_params = [{transform_indices = @transform_0, window_bounds = array<i64: 4, 4>}, {pipeline_mode = #tpu.pipeline_mode<synchronous>, transform_indices = @transform_1, window_bounds = array<i64: 1, 128>}, {transform_indices = @transform_2, window_bounds = array<i64: 4, 128>}]} {
    %c0 = arith.constant 0 : index
    %c0_0 = arith.constant 0 : index
    %0 = vector.load %arg1[%c0, %c0_0] : memref<4x4xf32, #tpu.memory_space<vmem>>, vector<4x4xf32>
    %1 = tpu.iota {dimensions = array<i32: 1>} : vector<1x128xi32>
    %2 = vector.extract_strided_slice %0 {offsets = [0, 0], sizes = [4, 1], strides = [1, 1]} : vector<4x4xf32> to vector<4x1xf32>
    %3 = vector.shape_cast %2 : vector<4x1xf32> to vector<4x1xf32>
    %4 = vector.broadcast %3 : vector<4x1xf32> to vector<4x128xf32>
    %5 = vector.extract_strided_slice %0 {offsets = [0, 1], sizes = [4, 1], strides = [1, 1]} : vector<4x4xf32> to vector<4x1xf32>
    %6 = vector.shape_cast %5 : vector<4x1xf32> to vector<4x1xf32>
    %7 = vector.broadcast %6 : vector<4x1xf32> to vector<4x128xf32>
    %c32_i32 = arith.constant 32 : i32
    %8 = vector.broadcast %c32_i32 : i32 to vector<1x128xi32>
    %9 = arith.cmpi sge, %1, %8 : vector<1x128xi32>
    %10 = vector.shape_cast %9 : vector<1x128xi1> to vector<1x128xi1>
    %11 = vector.broadcast %10 : vector<1x128xi1> to vector<4x128xi1>
    %12 = arith.select %11, %7, %4 : vector<4x128xi1>, vector<4x128xf32>
    %13 = vector.extract_strided_slice %0 {offsets = [0, 2], sizes = [4, 1], strides = [1, 1]} : vector<4x4xf32> to vector<4x1xf32>
    %14 = vector.shape_cast %13 : vector<4x1xf32> to vector<4x1xf32>
    %15 = vector.broadcast %14 : vector<4x1xf32> to vector<4x128xf32>
    %c64_i32 = arith.constant 64 : i32
    %16 = vector.broadcast %c64_i32 : i32 to vector<1x128xi32>
    %17 = arith.cmpi sge, %1, %16 : vector<1x128xi32>
    %18 = vector.shape_cast %17 : vector<1x128xi1> to vector<1x128xi1>
    %19 = vector.broadcast %18 : vector<1x128xi1> to vector<4x128xi1>
    %20 = arith.select %19, %15, %12 : vector<4x128xi1>, vector<4x128xf32>
    %21 = vector.extract_strided_slice %0 {offsets = [0, 3], sizes = [4, 1], strides = [1, 1]} : vector<4x4xf32> to vector<4x1xf32>
    %22 = vector.shape_cast %21 : vector<4x1xf32> to vector<4x1xf32>
    %23 = vector.broadcast %22 : vector<4x1xf32> to vector<4x128xf32>
    %c96_i32 = arith.constant 96 : i32
    %24 = vector.broadcast %c96_i32 : i32 to vector<1x128xi32>
    %25 = arith.cmpi sge, %1, %24 : vector<1x128xi32>
    %26 = vector.shape_cast %25 : vector<1x128xi1> to vector<1x128xi1>
    %27 = vector.broadcast %26 : vector<1x128xi1> to vector<4x128xi1>
    %28 = arith.select %27, %23, %20 : vector<4x128xi1>, vector<4x128xf32>
    %c0_1 = arith.constant 0 : index
    %c0_2 = arith.constant 0 : index
    %29 = vector.load %arg2[%c0_1, %c0_2] : memref<1x128xf32, #tpu.memory_space<vmem>>, vector<1x128xf32>
    %30 = vector.broadcast %29 : vector<1x128xf32> to vector<4x128xf32>
    %31 = arith.mulf %28, %30 : vector<4x128xf32>
    %32 = math.cos %31 : vector<4x128xf32>
    %c0_3 = arith.constant 0 : index
    %c0_4 = arith.constant 0 : index
    %33 = vector.load %arg3[%c0_3, %c0_4] : memref<4x128xf32, #tpu.memory_space<vmem>>, vector<4x128xf32>
    tpu.vector_store %arg3[%c0_3, %c0_4], %32 {strides = array<i32>} : memref<4x128xf32, #tpu.memory_space<vmem>>, vector<4x128xf32>,
    return
  }
  func.func @transform_0(%arg0: i32) -> (i32, i32) {
    %c0_i32 = arith.constant 0 : i32
    %c0_i32_0 = arith.constant 0 : i32
    return %arg0, %c0_i32 : i32, i32
  }
  func.func @transform_1(%arg0: i32) -> (i32, i32) {
    %c0_i32 = arith.constant 0 : i32
    %c0_i32_0 = arith.constant 0 : i32
    %c0_i32_1 = arith.constant 0 : i32
    return %c0_i32, %c0_i32_0 : i32, i32
  }
  func.func @transform_2(%arg0: i32) -> (i32, i32) {
    %c0_i32 = arith.constant 0 : i32
    %c0_i32_0 = arith.constant 0 : i32
    return %arg0, %c0_i32 : i32, i32
  }
}

</mosaic_0001>

<llo_original>
// kernel: tpu_custom_call.1
$region0: #{tpu_custom_call.1}
  #allocation0 [shape = 'u32[]', space=smem, size = 0x4, offset = 0x4, fixed_abs, tag = 'smem constant byte address 0x4 - core index']
  #allocation1 [shape = 'u32[144,128]{1,0:T(1,128)}', space=vmem, size = 0x12000, scoped, tag = 'internal scratch']
  %s0 = inlined_call_operand.hbm [shape: f32[4,4], index: 0, kind: input, shape index: {}]
  %s1 = inlined_call_operand.vmem [shape: f32[1,128], index: 1, kind: input, shape index: {}]
  %s2 = inlined_call_operand.hbm [shape: f32[4,128], index: 2, kind: output, shape index: {}]
  %s3 = sld [smem:[#allocation0]]
  $region22: #{tpu_custom_call.1} parent=0
    _
  %s5 = ssub.s32 1, %s3
  %s6 = scalar_select 0, %s5, %s3
  $region1: #{tpu_custom_call.1} parent=0
    #allocation2 [shape = 'u8[2048]{0}', space=vmem, size = 0x800, scoped, tag = 'input window, operand 0, single buffered']
    #allocation3 [shape = 's32[1]{0}', space=sflag, size = 0x4, scoped, tag = 'scoped memory for tpu_custom_call.1']
    #allocation4 [shape = 's32[1]{0}', space=sflag, size = 0x4, scoped, tag = 'scoped memory for tpu_custom_call.1']
    #allocation5 [shape = 'u8[2048]{0}', space=vmem, size = 0x800, scoped, tag = 'output window, operand 0, single buffered']
    %7 = vsyncpa [#allocation3], 0
    %8 = vsyncpa [#allocation4], 0
    // Predicated region
    $region2: #{tpu_custom_call.1} parent=1 // pred_check
      _
    $region3: #{tpu_custom_call.1} parent=1 // pred_check_branch
      %10 = sbr.rel (0) target = $region5
    $region4: #{tpu_custom_call.1} parent=1 // pred_region
      %s12 = ssub.s32 64, 64
      %13 = vsyncadd [#allocation3], %s12
      %s15 = sshll.u32 [#allocation2], 4
      %s16 = int_to_ptr.vmem [resolvable:$true] %s15
      %18 = dma.hbm_to_vmem [thread:$0]  %s0, 64, %s16, [#allocation3]
    $region5: #{tpu_custom_call.1} parent=1 // pred_fallthru
      _
    // Predicated region
    $region6: #{tpu_custom_call.1} parent=1 // pred_check
      _
    $region7: #{tpu_custom_call.1} parent=1 // pred_check_branch
      %20 = sbr.rel (0) target = $region9
    $region8: #{tpu_custom_call.1} parent=1 // pred_region
      _
    $region9: #{tpu_custom_call.1} parent=1 // pred_fallthru
      _
    // Predicated region
    $region10: #{tpu_custom_call.1} parent=1 // pred_check
      _
    $region11: #{tpu_custom_call.1} parent=1 // pred_check_branch
      %22 = sbr.rel (0) target = $region13
    $region12: #{tpu_custom_call.1} parent=1 // pred_region
      %23 = dma.done [#allocation3], 64
    $region13: #{tpu_custom_call.1} parent=1 // pred_fallthru
      _
    %v24 = vld [vmem:[#allocation2] sm:$0xf]
    %v25 = vlaneseq
    %v26 = vand.u32 %v25, 127
    %28 = vset.pattern.permute.xlu0 0
    %29 = vperm.xlu0 %28, %v24
    %v30 = vpop.permute.xlu0 %29
    %32 = vset.pattern.permute.xlu0 1
    %33 = vperm.xlu0 %32, %v24
    %v34 = vpop.permute.xlu0 %33
    %vm36 = vcmp.ge.s32.totalorder %v26, 32
    %v37 = vsel %vm36, 1, 0
    %vm38 = vcmp.eq.s32.totalorder %v37, 1
    %v39 = vsel %vm38, %v34, %v30
    %40 = vset.pattern.permute.xlu0 2
    %41 = vperm.xlu0 %40, %v24
    %v42 = vpop.permute.xlu0 %41
    %vm44 = vcmp.ge.s32.totalorder %v26, 64
    %v45 = vsel %vm44, 1, 0
    %vm46 = vcmp.eq.s32.totalorder %v45, 1
    %v47 = vsel %vm46, %v42, %v39
    %48 = vset.pattern.permute.xlu0 3
    %49 = vperm.xlu0 %48, %v24
    %v50 = vpop.permute.xlu0 %49
    %vm52 = vcmp.ge.s32.totalorder %v26, 96
    %v53 = vsel %vm52, 1, 0
    %vm54 = vcmp.eq.s32.totalorder %v53, 1
    %v55 = vsel %vm54, %v50, %v47
    %v56 = vld [vmem:[%s1] sm:$0x1]
    %v58 = vlaneseq
    %v59 = vshrl.u32 %v58, 7
    %v60 = vsub.s32 0, %v59
    %v61 = vrot.slane %v56, %v60
    %v63 = vmul.f32 %v55, %v61
    %v64 = vand.u32 2147483647, %v63
    %vm65 = vcmp.le.f32.partialorder %v64, 0.7853982
    %vm66 = vcmp.lt.s32.totalorder %v63, 0
    %v67 = vand.u32 %v63, 2139095040
    %v68 = vshrl.u32 %v67, 23
    %v69 = vsub.s32 %v68, 127
    %v70 = vand.u32 2147483647, %v63
    %v71 = vand.u32 %v70, 8388607
    %v72 = vor.u32 %v71, 8388608
    %v73 = vsub.s32 0, %v72
    %v74 = vadd.s32 %v69, 1
    %vm75 = vcmp.gt.s32.totalorder %v74, 0
    %v76 = vsel %vm75, %v74, 0
    %v77 = vshrl.u32 %v76, 5
    %v78 = vand.u32 %v76, 31
    %v79 = vsub.s32 32, %v78
    %v80 = vshrl.u32 683565275, %v79
    %v81 = vshll.u32 683565275, %v78
    %v82 = vshrl.u32 2475754826, %v79
    %v83 = vor.u32 %v81, %v82
    %v84 = vshll.u32 2475754826, %v78
    %v85 = vshrl.u32 2131351028, %v79
    %v86 = vor.u32 %v84, %v85
    %v87 = vshll.u32 2131351028, %v78
    %v88 = vshrl.u32 2102212464, %v79
    %v89 = vor.u32 %v87, %v88
    %v90 = vshll.u32 2102212464, %v78
    %v91 = vshrl.u32 920167782, %v79
    %v92 = vor.u32 %v90, %v91
    %v93 = vshll.u32 920167782, %v78
    %v94 = vshrl.u32 1326507024, %v79
    %v95 = vor.u32 %v93, %v94
    %vm96 = vcmp.lt.s32.totalorder %v77, 1
    %vm97 = vcmp.lt.s32.totalorder %v77, 2
    %vm98 = vcmp.lt.s32.totalorder %v77, 3
    %vm99 = vcmp.lt.s32.totalorder %v77, 4
    %v100 = vsel %vm96, %v80, %v83
    %v101 = vsel %vm99, %v89, 2102212464
    %v102 = vsel %vm98, %v86, %v101
    %v103 = vsel %vm97, %v100, %v102
    %v104 = vsel %vm96, %v83, %v86
    %v105 = vsel %vm99, %v92, 920167782
    %v106 = vsel %vm98, %v89, %v105
    %v107 = vsel %vm97, %v104, %v106
    %v108 = vsel %vm96, %v86, %v89
    %v109 = vsel %vm99, %v95, 1326507024
    %v110 = vsel %vm98, %v92, %v109
    %v111 = vsel %vm97, %v108, %v110
    %v112 = vshll.u32 %v72, 8
    %v113 = vmul.u32.u64.compose %v112, %v111
    %v114 = vextract.low.u32 %v113
    %v115 = vextract.high.u32 %v113
    %v116 = vmul.u32.u64.compose %v112, %v107
    %v117 = vextract.low.u32 %v116
    %v118 = vextract.high.u32 %v116
    %v119 = vmul.u32 %v112, %v103
    %v120 = vadd.s32 %v115, %v117
    %vm121 = vc.u32 %v115, %v117
    %v122 = vadd.s32 %v118, 1
    %v123 = vsel %vm121, %v122, %v118
    %v124 = vadd.s32 %v119, %v123
    %v125 = vadd.s32 %v124, 536870912
    %v126 = vshrl.u32 %v125, 30
    %v127 = vshll.u32 %v126, 30
    %v128 = vsub.s32 %v124, %v127
    %vm129 = vcmp.lt.s32.totalorder %v128, 0
    %v130 = vsub.s32 0, %v128
    %v131 = vsel %vm129, %v130, %v128
    %v132 = vclz %v131
    %v133 = vsub.s32 %v132, 2
    %vm134 = vcmp.gt.s32.totalorder 0, %v133
    %v135 = vsel %vm134, 0, %v133
    %v136 = vsub.s32 32, %v135
    %v137 = vshll.u32 %v128, %v135
    %v138 = vshrl.u32 %v120, %v136
    %v139 = vor.u32 %v137, %v138
    %v140 = vsub.s32 4294967266, %v135
    %v141 = vadd.s32 %v140, 127
    %v142 = vshll.u32 %v141, 23
    %v143 = vor.u32 4788187, %v142
    %v144 = vand.u32 2147483647, %v143
    %v146 = vcvt.s32.f32 %v139
    %v147 = vmul.f32 %v146, %v144
    %v148 = vxor.u32 %v147, 2147483648
    %v149 = vsel %vm66, %v148, %v147
    %v150 = vsub.s32 4, %v126
    %v151 = vsel %vm66, %v150, %v126
    %v152 = vsel %vm65, %v63, %v149
    %v153 = vsel %vm65, 0, %v151
    %v154 = vcosq.f32.pop %v152
    %v155 = vsinq.f32.pop %v152
    %vm156 = vweird.f32 %v63
    %v157 = vand.u32 %v153, 3
    %vm158 = vcmp.lt.s32.totalorder %v157, 2
    %vm159 = vcmp.eq.s32.totalorder %v157, 0
    %v160 = vxor.u32 %v155, 2147483648
    %v161 = vsel %vm159, %v154, %v160
    %vm162 = vcmp.eq.s32.totalorder %v157, 2
    %v163 = vxor.u32 %v154, 2147483648
    %v164 = vsel %vm162, %v163, %v155
    %v165 = vsel %vm158, %v161, %v164
    %v166 = vsel %vm156, nan, %v165
    %167 = vst [vmem:[#allocation5] sm:$0xf] %v166
    // Predicated region
    $region14: #{tpu_custom_call.1} parent=1 // pred_check
      _
    $region15: #{tpu_custom_call.1} parent=1 // pred_check_branch
      %169 = sbr.rel (0) target = $region17
    $region16: #{tpu_custom_call.1} parent=1 // pred_region
      %s171 = ssub.s32 64, 64
      %172 = vsyncadd [#allocation4], %s171
      %s174 = sshll.u32 [#allocation5], 4
      %s175 = int_to_ptr.vmem [resolvable:$true] %s174
      %177 = dma.vmem_to_hbm [thread:$0]  %s175, 64, %s2, [#allocation4]
    $region17: #{tpu_custom_call.1} parent=1 // pred_fallthru
      _
    // Predicated region
    $region18: #{tpu_custom_call.1} parent=1 // pred_check
      _
    $region19: #{tpu_custom_call.1} parent=1 // pred_check_branch
      %179 = sbr.rel (0) target = $region21
    $region20: #{tpu_custom_call.1} parent=1 // pred_region
      %180 = dma.done [#allocation4], 64
    $region21: #{tpu_custom_call.1} parent=1 // pred_fallthru
      _
    %181 = vsyncpa [#allocation3], 1
    %182 = vsyncpa [#allocation4], 1

</llo_original>
